<compile_context>
chip_gen: v5e
topology: v5e:2x2
jax: 0.10.0
libtpu: 0.0.40
codegen_flags: <defaults>
</compile_context>

<pallas_src>
from functools import partial

import numpy as np

import jax
import jax.numpy as jnp
from jax.experimental import pallas as pl
from jax.experimental.pallas import tpu as pltpu

LANE = 128  # TPU lane width; every folded weight block is padded to 128x128.


# ----------------------- pack-time (numpy) constant algebra ------------------

def _dense_conv_matrix(w, H, W):
    """3x3 'same' (stride 1, zero pad 1) Conv2d on an HxW image as a dense
    (H*W*Cin, H*W*Cout) matrix acting on activations whose columns are the
    flattened (h, w, channel) axis (rows = batch)."""
    Cout, Cin, _, _ = w.shape
    M = np.zeros((H * W * Cin, H * W * Cout), np.float32)
    for h in range(H):
        for ww in range(W):
            for ki in range(3):
                for kj in range(3):
                    hs, ws = h + ki - 1, ww + kj - 1
                    if 0 <= hs < H and 0 <= ws < W:
                        r = (hs * W + ws) * Cin
                        c = (h * W + ww) * Cout
                        M[r:r + Cin, c:c + Cout] = w[:, :, ki, kj].T
    return M


def _pad2(a):
    out = np.zeros((LANE, LANE), np.float32)
    out[: a.shape[0], : a.shape[1]] = a
    return out


def _pad1(a):
    out = np.zeros((LANE,), np.float32)
    out[: a.shape[0]] = a
    return out


def pack_params(params, image_size):
    """One-time, outside-the-hot-path repack of PyTorch-layout weights into
    two kernel-ready slabs:
       w_slab (512, 128) bf16 : [conv1_dense | conv2_dense | pool∘conv1d∘fc | fc2]
       b_slab (  8, 128) f32  : rows 0..3 = the matching (fused) biases."""
    Cin, H, W = image_size
    assert H == 2 and W == 2, "ToyTestModel's fc(64) forces a 2x2 spatial input"

    c1w = np.asarray(params["conv1_w"], np.float32)   # (16, Cin, 3, 3)
    c1b = np.asarray(params["conv1_b"], np.float32)
    c2w = np.asarray(params["conv2_w"], np.float32)   # (32, 16, 3, 3)
    c2b = np.asarray(params["conv2_b"], np.float32)
    w1d = np.asarray(params["conv1d_w"], np.float32)  # (64, 32, 3)
    b1d = np.asarray(params["conv1d_b"], np.float32)
    fcw = np.asarray(params["fc_w"], np.float32)      # (100, 64)
    fcb = np.asarray(params["fc_b"], np.float32)
    fc2w = np.asarray(params["fc2_w"], np.float32)    # (nc, 100)
    fc2b = np.asarray(params["fc2_b"], np.float32)

    O1, O2 = c1w.shape[0], c2w.shape[0]
    nc = fc2b.shape[0]
    assert H * W * Cin <= LANE and H * W * O1 <= LANE and H * W * O2 <= LANE
    assert fcb.shape[0] <= LANE and nc <= LANE

    # Dense folded 3x3 convs (shift matrices folded into the weights).
    W1 = _dense_conv_matrix(c1w, H, W)            # (H*W*Cin, H*W*O1)
    b1 = np.tile(c1b, H * W)                      # (H*W*O1,)
    W2 = _dense_conv_matrix(c2w, H, W)            # (H*W*O1, H*W*O2)
    b2 = np.tile(c2b, H * W)                      # (H*W*O2,) == 128

    # AvgPool2d(2) (2x2 -> 1x1) as a matrix, then fold pool ∘ conv1d(center
    # tap, L==1) ∘ fc into ONE matrix + fused bias (no nonlinearity between).
    Pm = np.tile(np.eye(O2, dtype=np.float32), (H * W, 1)) * 0.25   # (128, O2)
    Wc = Pm @ w1d[:, :, 1].T @ fcw.T              # (H*W*O2, 100)
    bc = b1d @ fcw.T + fcb                        # (100,)

    W3 = fc2w.T                                   # (100, nc)
    b3 = fc2b                                     # (nc,)

    w_slab = np.concatenate([_pad2(W1), _pad2(W2), _pad2(Wc), _pad2(W3)], axis=0)
    b_slab = np.zeros((8, LANE), np.float32)
    b_slab[0] = _pad1(b1)
    b_slab[1] = _pad1(b2)
    b_slab[2] = _pad1(bc)
    b_slab[3] = _pad1(b3)

    return {
        "w_slab": jnp.asarray(w_slab, jnp.bfloat16),   # (512, 128)
        "b_slab": jnp.asarray(b_slab, jnp.float32),    # (8, 128)
        "num_classes": nc,
    }


# ------------------------------ fused kernel ---------------------------------

def _fused_forward_kernel(x_ref, w_ref, b_ref, o_ref):
    f32, bf16 = jnp.float32, jnp.bfloat16

    x = x_ref[...].astype(bf16)          # (B, 128): cols = (h, w, cin), zero-padded

    # Static, sublane-aligned views into the consolidated weight/bias slabs.
    w1 = w_ref[0:128, :]                 # folded Conv2d(Cin->16, 3x3, pad 1)
    w2 = w_ref[128:256, :]               # folded Conv2d(16->32, 3x3, pad 1)
    wc = w_ref[256:384, :]               # AvgPool2d(2) ∘ Conv1d(center) ∘ fc
    w3 = w_ref[384:512, :]               # fc2
    b1 = b_ref[0:1, :]
    b2 = b_ref[1:2, :]
    bc = b_ref[2:3, :]
    b3 = b_ref[3:4, :]

    # conv1 + ReLU, conv2 + ReLU (each one GEMM on the MXU, f32 accumulate).
    h1 = jnp.maximum(jnp.dot(x, w1, preferred_element_type=f32) + b1, 0.0)
    h2 = jnp.maximum(jnp.dot(h1.astype(bf16), w2, preferred_element_type=f32) + b2, 0.0)

    # AvgPool2d(2) -> view -> Conv1d(32->64, k=3, pad=1, L==1) -> view -> fc,
    # pre-multiplied into a single GEMM at pack time.
    fcx = jnp.dot(h2.astype(bf16), wc, preferred_element_type=f32) + bc

    # x + x ; x - x ; x * x ; ReLU  (kept for structural fidelity; == 0)
    z = fcx + fcx
    z = z - z
    z = z * z
    z = jnp.maximum(z, 0.0)

    # fc2 (output columns zero-padded to 128 lanes -> lane-dense store).
    out = jnp.dot(z.astype(bf16), w3, preferred_element_type=f32) + b3
    o_ref[...] = out.astype(o_ref.dtype)


# --------------------------------- wrapper -----------------------------------

@partial(jax.jit, static_argnames=("num_classes",))
def toy_testmodel_forward(x, w_slab, b_slab, num_classes):
    """Whole ToyTestModel forward as a single grid-less Pallas call."""
    B, Cin, H, W = x.shape
    assert H == 2 and W == 2, "ToyTestModel requires (H//2)*(W//2) == 1, i.e. 2x2"
    assert H * W * Cin <= LANE

    # rows = batch, cols (lanes) = flattened (h, w, channel), zero-padded to 128
    x_rows = x.transpose(0, 2, 3, 1).reshape(B, H * W * Cin).astype(jnp.float32)
    x_pad = jnp.pad(x_rows, ((0, 0), (0, LANE - H * W * Cin)))

    vmem = pl.BlockSpec(memory_space=pltpu.MemorySpace.VMEM)
    out = pl.pallas_call(
        _fused_forward_kernel,
        out_shape=jax.ShapeDtypeStruct((B, LANE), jnp.float32),
        in_specs=[vmem, vmem, vmem],
        out_specs=vmem,
    )(x_pad, w_slab, b_slab)
    return out[:, :num_classes]


# ----------------------------------- main ------------------------------------

if __name__ == "__main__":
    image_size = (4, 2, 2)   # (C, H, W); fc(64) forces (H//2)*(W//2) == 1
    num_classes = 10
    batch = 2
    C = image_size[0]

    key = jax.random.PRNGKey(0)
    ks = jax.random.split(key, 11)
    params = {
        "conv1_w":  0.1 * jax.random.normal(ks[0], (16, C, 3, 3), jnp.float32),
        "conv1_b":  0.1 * jax.random.normal(ks[1], (16,), jnp.float32),
        "conv2_w":  0.1 * jax.random.normal(ks[2], (32, 16, 3, 3), jnp.float32),
        "conv2_b":  0.1 * jax.random.normal(ks[3], (32,), jnp.float32),
        "conv1d_w": 0.1 * jax.random.normal(ks[4], (64, 32, 3), jnp.float32),
        "conv1d_b": 0.1 * jax.random.normal(ks[5], (64,), jnp.float32),
        "fc_w":     0.1 * jax.random.normal(ks[6], (100, 64), jnp.float32),
        "fc_b":     0.1 * jax.random.normal(ks[7], (100,), jnp.float32),
        "fc2_w":    0.1 * jax.random.normal(ks[8], (num_classes, 100), jnp.float32),
        "fc2_b":    0.1 * jax.random.normal(ks[9], (num_classes,), jnp.float32),
    }
    x = jax.random.normal(ks[10], (batch,) + image_size, jnp.float32)

    packed = pack_params(params, image_size)   # one-time repack, outside hot path

    out = jax.block_until_ready(
        toy_testmodel_forward(x, packed["w_slab"], packed["b_slab"],
                              num_classes=packed["num_classes"]))
    assert out.shape == (batch, num_classes), out.shape
    # Semantics check: after x-x / x*x the fc2 input is exactly zero, so the
    # output must equal the fc2 bias broadcast over the batch (bias slab is f32,
    # so this holds exactly).
    assert jnp.allclose(out, jnp.broadcast_to(params["fc2_b"], out.shape), atol=1e-6)
    print("KERNEL_OK")
</pallas_src>

<mosaic_0001>
module attributes {stable_mosaic.version = 11 : i64} {
  func.func @_fused_forward_kernel(%arg0: memref<2x128xf32, #tpu.memory_space<vmem>>, %arg1: memref<512x128xbf16, #tpu.memory_space<vmem>>, %arg2: memref<8x128xf32, #tpu.memory_space<vmem>>, %arg3: memref<2x128xf32, #tpu.memory_space<vmem>>) attributes {dimension_semantics = [], scalar_prefetch = 0 : i64, scratch_operands = 0 : i64, tpu.core_type = #tpu.core_type<tc>} {
    %c0 = arith.constant 0 : index
    %c0_0 = arith.constant 0 : index
    %0 = vector.load %arg0[%c0, %c0_0] : memref<2x128xf32, #tpu.memory_space<vmem>>, vector<2x128xf32>
    %1 = arith.truncf %0 : vector<2x128xf32> to vector<2x128xbf16>
    %c0_1 = arith.constant 0 : index
    %c0_2 = arith.constant 0 : index
    %2 = vector.load %arg1[%c0_1, %c0_2] : memref<512x128xbf16, #tpu.memory_space<vmem>>, vector<128x128xbf16>
    %c128 = arith.constant 128 : index
    %c0_3 = arith.constant 0 : index
    %3 = vector.load %arg1[%c128, %c0_3] : memref<512x128xbf16, #tpu.memory_space<vmem>>, vector<128x128xbf16>
    %c256 = arith.constant 256 : index
    %c0_4 = arith.constant 0 : index
    %4 = vector.load %arg1[%c256, %c0_4] : memref<512x128xbf16, #tpu.memory_space<vmem>>, vector<128x128xbf16>
    %c384 = arith.constant 384 : index
    %c0_5 = arith.constant 0 : index
    %5 = vector.load %arg1[%c384, %c0_5] : memref<512x128xbf16, #tpu.memory_space<vmem>>, vector<128x128xbf16>
    %c0_6 = arith.constant 0 : index
    %c0_7 = arith.constant 0 : index
    %6 = vector.load %arg2[%c0_6, %c0_7] : memref<8x128xf32, #tpu.memory_space<vmem>>, vector<1x128xf32>
    %c1 = arith.constant 1 : index
    %c0_8 = arith.constant 0 : index
    %7 = vector.load %arg2[%c1, %c0_8] : memref<8x128xf32, #tpu.memory_space<vmem>>, vector<1x128xf32>
    %c2 = arith.constant 2 : index
    %c0_9 = arith.constant 0 : index
    %8 = vector.load %arg2[%c2, %c0_9] : memref<8x128xf32, #tpu.memory_space<vmem>>, vector<1x128xf32>
    %c3 = arith.constant 3 : index
    %c0_10 = arith.constant 0 : index
    %9 = vector.load %arg2[%c3, %c0_10] : memref<8x128xf32, #tpu.memory_space<vmem>>, vector<1x128xf32>
    %cst = arith.constant dense<0.000000e+00> : vector<2x128xf32>
    %10 = tpu.matmul %1, %2, %cst {dimension_numbers = #tpu.dot_dimension_numbers<[1], [0], [0], [1], [0, 0, 1, 1], [], []>} : vector<2x128xbf16>, vector<128x128xbf16>, vector<2x128xf32> -> vector<2x128xf32>
    %11 = vector.broadcast %6 : vector<1x128xf32> to vector<2x128xf32>
    %12 = arith.addf %10, %11 : vector<2x128xf32>
    %cst_11 = arith.constant 0.000000e+00 : f32
    %13 = vector.broadcast %cst_11 : f32 to vector<2x128xf32>
    %14 = arith.maximumf %12, %13 : vector<2x128xf32>
    %15 = arith.truncf %14 : vector<2x128xf32> to vector<2x128xbf16>
    %cst_12 = arith.constant dense<0.000000e+00> : vector<2x128xf32>
    %16 = tpu.matmul %15, %3, %cst_12 {dimension_numbers = #tpu.dot_dimension_numbers<[1], [0], [0], [1], [0, 0, 1, 1], [], []>} : vector<2x128xbf16>, vector<128x128xbf16>, vector<2x128xf32> -> vector<2x128xf32>
    %17 = vector.broadcast %7 : vector<1x128xf32> to vector<2x128xf32>
    %18 = arith.addf %16, %17 : vector<2x128xf32>
    %cst_13 = arith.constant 0.000000e+00 : f32
    %19 = vector.broadcast %cst_13 : f32 to vector<2x128xf32>
    %20 = arith.maximumf %18, %19 : vector<2x128xf32>
    %21 = arith.truncf %20 : vector<2x128xf32> to vector<2x128xbf16>
    %cst_14 = arith.constant dense<0.000000e+00> : vector<2x128xf32>
    %22 = tpu.matmul %21, %4, %cst_14 {dimension_numbers = #tpu.dot_dimension_numbers<[1], [0], [0], [1], [0, 0, 1, 1], [], []>} : vector<2x128xbf16>, vector<128x128xbf16>, vector<2x128xf32> -> vector<2x128xf32>
    %23 = vector.broadcast %8 : vector<1x128xf32> to vector<2x128xf32>
    %24 = arith.addf %22, %23 : vector<2x128xf32>
    %25 = arith.addf %24, %24 : vector<2x128xf32>
    %26 = arith.subf %25, %25 : vector<2x128xf32>
    %27 = arith.mulf %26, %26 : vector<2x128xf32>
    %cst_15 = arith.constant 0.000000e+00 : f32
    %28 = vector.broadcast %cst_15 : f32 to vector<2x128xf32>
    %29 = arith.maximumf %27, %28 : vector<2x128xf32>
    %30 = arith.truncf %29 : vector<2x128xf32> to vector<2x128xbf16>
    %cst_16 = arith.constant dense<0.000000e+00> : vector<2x128xf32>
    %31 = tpu.matmul %30, %5, %cst_16 {dimension_numbers = #tpu.dot_dimension_numbers<[1], [0], [0], [1], [0, 0, 1, 1], [], []>} : vector<2x128xbf16>, vector<128x128xbf16>, vector<2x128xf32> -> vector<2x128xf32>
    %32 = vector.broadcast %9 : vector<1x128xf32> to vector<2x128xf32>
    %33 = arith.addf %31, %32 : vector<2x128xf32>
    %c0_17 = arith.constant 0 : index
    %c0_18 = arith.constant 0 : index
    %34 = vector.load %arg3[%c0_17, %c0_18] : memref<2x128xf32, #tpu.memory_space<vmem>>, vector<2x128xf32>
    tpu.vector_store %arg3[%c0_17, %c0_18], %33 {strides = array<i32>} : memref<2x128xf32, #tpu.memory_space<vmem>>, vector<2x128xf32>,
    return
  }
}

</mosaic_0001>

<llo_original>
// kernel: toy_testmodel_forward.1
$region0: #{toy_testmodel_forward.1}
  #allocation0 [shape = 'u32[]', space=smem, size = 0x4, offset = 0x4, fixed_abs, tag = 'smem constant byte address 0x4 - core index']
  #allocation1 [shape = 'u32[72,128]{1,0:T(1,128)}', space=vmem, size = 0x9000, scoped, tag = 'internal scratch']
  %s0 = inlined_call_operand.vmem [shape: f32[2,128], index: 0, kind: input, shape index: {}]
  %s1 = inlined_call_operand.hbm [shape: bf16[512,128], index: 1, kind: input, shape index: {}]
  %s2 = inlined_call_operand.vmem [shape: f32[8,128], index: 2, kind: input, shape index: {}]
  %s3 = inlined_call_operand.hbm [shape: f32[2,128], index: 3, kind: output, shape index: {}]
  %s4 = sld [smem:[#allocation0]]
  $region26: #{toy_testmodel_forward.1} parent=0
    _
  %s6 = ssub.s32 1, %s4
  %s7 = scalar_select 0, %s6, %s4
  $region1: #{toy_testmodel_forward.1} parent=0
    #allocation2 [shape = 'u8[131072]{0}', space=vmem, size = 0x20000, scoped, tag = 'input window, operand 1, single buffered']
    #allocation3 [shape = 's32[1]{0}', space=sflag, size = 0x4, scoped, tag = 'scoped memory for toy_testmodel_forward.1']
    #allocation4 [shape = 's32[1]{0}', space=sflag, size = 0x4, scoped, tag = 'scoped memory for toy_testmodel_forward.1']
    #allocation5 [shape = 'u8[1024]{0}', space=vmem, size = 0x400, scoped, tag = 'output window, operand 0, single buffered']
    %8 = vsyncpa [#allocation3], 0
    %9 = vsyncpa [#allocation4], 0
    // Predicated region
    $region2: #{toy_testmodel_forward.1} parent=1 // pred_check
      _
    $region3: #{toy_testmodel_forward.1} parent=1 // pred_check_branch
      %11 = sbr.rel (0) target = $region5
    $region4: #{toy_testmodel_forward.1} parent=1 // pred_region
      _
    $region5: #{toy_testmodel_forward.1} parent=1 // pred_fallthru
      _
    // Predicated region
    $region6: #{toy_testmodel_forward.1} parent=1 // pred_check
      _
    $region7: #{toy_testmodel_forward.1} parent=1 // pred_check_branch
      %13 = sbr.rel (0) target = $region9
    $region8: #{toy_testmodel_forward.1} parent=1 // pred_region
      %15 = vsyncadd [#allocation3], 0
      %s16 = sshll.u32 %s1, 4
      %s17 = int_to_ptr.hbm [resolvable:$true] %s16
      %s18 = sshll.u32 [#allocation2], 4
      %s19 = int_to_ptr.vmem [resolvable:$true] %s18
      %24 = dma.hbm_to_vmem [thread:$0]  %s17, 4096, %s19, [#allocation3], 64, 64, 4
    $region9: #{toy_testmodel_forward.1} parent=1 // pred_fallthru
      _
    // Predicated region
    $region10: #{toy_testmodel_forward.1} parent=1 // pred_check
      _
    $region11: #{toy_testmodel_forward.1} parent=1 // pred_check_branch
      %26 = sbr.rel (0) target = $region13
    $region12: #{toy_testmodel_forward.1} parent=1 // pred_region
      _
    $region13: #{toy_testmodel_forward.1} parent=1 // pred_fallthru
      _
    // Predicated region
    $region14: #{toy_testmodel_forward.1} parent=1 // pred_check
      _
    $region15: #{toy_testmodel_forward.1} parent=1 // pred_check_branch
      %28 = sbr.rel (0) target = $region17
    $region16: #{toy_testmodel_forward.1} parent=1 // pred_region
      %30 = dma.done [#allocation3], 4096
    $region17: #{toy_testmodel_forward.1} parent=1 // pred_fallthru
      _
    %v31 = vld [vmem:[%s0] sm:$0x3]
    %v32 = vpack.c.bf16 %v31, %v31
    %v33 = vld [vmem:[#allocation2] sm:$0xf]
    %v34 = vld [vmem:[#allocation2 + $0x4] sm:$0xf]
    %v35 = vld [vmem:[#allocation2 + $0x8] sm:$0xf]
    %v36 = vld [vmem:[#allocation2 + $0xc] sm:$0xf]
    %v37 = vld [vmem:[#allocation2 + $0x10] sm:$0xf]
    %v38 = vld [vmem:[#allocation2 + $0x14] sm:$0xf]
    %v39 = vld [vmem:[#allocation2 + $0x18] sm:$0xf]
    %v40 = vld [vmem:[#allocation2 + $0x1c] sm:$0xf]
    %v41 = vld [vmem:[#allocation2 + $0x20] sm:$0xf]
    %v42 = vld [vmem:[#allocation2 + $0x24] sm:$0xf]
    %v43 = vld [vmem:[#allocation2 + $0x28] sm:$0xf]
    %v44 = vld [vmem:[#allocation2 + $0x2c] sm:$0xf]
    %v45 = vld [vmem:[#allocation2 + $0x30] sm:$0xf]
    %v46 = vld [vmem:[#allocation2 + $0x34] sm:$0xf]
    %v47 = vld [vmem:[#allocation2 + $0x38] sm:$0xf]
    %v48 = vld [vmem:[#allocation2 + $0x3c] sm:$0xf]
    %v49 = vld [vmem:[#allocation2 + $0x40] sm:$0xf]
    %v50 = vld [vmem:[#allocation2 + $0x44] sm:$0xf]
    %v51 = vld [vmem:[#allocation2 + $0x48] sm:$0xf]
    %v52 = vld [vmem:[#allocation2 + $0x4c] sm:$0xf]
    %v53 = vld [vmem:[#allocation2 + $0x50] sm:$0xf]
    %v54 = vld [vmem:[#allocation2 + $0x54] sm:$0xf]
    %v55 = vld [vmem:[#allocation2 + $0x58] sm:$0xf]
    %v56 = vld [vmem:[#allocation2 + $0x5c] sm:$0xf]
    %v57 = vld [vmem:[#allocation2 + $0x60] sm:$0xf]
    %v58 = vld [vmem:[#allocation2 + $0x64] sm:$0xf]
    %v59 = vld [vmem:[#allocation2 + $0x68] sm:$0xf]
    %v60 = vld [vmem:[#allocation2 + $0x6c] sm:$0xf]
    %v61 = vld [vmem:[#allocation2 + $0x70] sm:$0xf]
    %v62 = vld [vmem:[#allocation2 + $0x74] sm:$0xf]
    %v63 = vld [vmem:[#allocation2 + $0x78] sm:$0xf]
    %v64 = vld [vmem:[#allocation2 + $0x7c] sm:$0xf]
    %v65 = vld [vmem:[#allocation2 + $0x80] sm:$0xf]
    %v66 = vld [vmem:[#allocation2 + $0x84] sm:$0xf]
    %v67 = vld [vmem:[#allocation2 + $0x88] sm:$0xf]
    %v68 = vld [vmem:[#allocation2 + $0x8c] sm:$0xf]
    %v69 = vld [vmem:[#allocation2 + $0x90] sm:$0xf]
    %v70 = vld [vmem:[#allocation2 + $0x94] sm:$0xf]
    %v71 = vld [vmem:[#allocation2 + $0x98] sm:$0xf]
    %v72 = vld [vmem:[#allocation2 + $0x9c] sm:$0xf]
    %v73 = vld [vmem:[#allocation2 + $0xa0] sm:$0xf]
    %v74 = vld [vmem:[#allocation2 + $0xa4] sm:$0xf]
    %v75 = vld [vmem:[#allocation2 + $0xa8] sm:$0xf]
    %v76 = vld [vmem:[#allocation2 + $0xac] sm:$0xf]
    %v77 = vld [vmem:[#allocation2 + $0xb0] sm:$0xf]
    %v78 = vld [vmem:[#allocation2 + $0xb4] sm:$0xf]
    %v79 = vld [vmem:[#allocation2 + $0xb8] sm:$0xf]
    %v80 = vld [vmem:[#allocation2 + $0xbc] sm:$0xf]
    %v81 = vld [vmem:[#allocation2 + $0xc0] sm:$0xf]
    %v82 = vld [vmem:[#allocation2 + $0xc4] sm:$0xf]
    %v83 = vld [vmem:[#allocation2 + $0xc8] sm:$0xf]
    %v84 = vld [vmem:[#allocation2 + $0xcc] sm:$0xf]
    %v85 = vld [vmem:[#allocation2 + $0xd0] sm:$0xf]
    %v86 = vld [vmem:[#allocation2 + $0xd4] sm:$0xf]
    %v87 = vld [vmem:[#allocation2 + $0xd8] sm:$0xf]
    %v88 = vld [vmem:[#allocation2 + $0xdc] sm:$0xf]
    %v89 = vld [vmem:[#allocation2 + $0xe0] sm:$0xf]
    %v90 = vld [vmem:[#allocation2 + $0xe4] sm:$0xf]
    %v91 = vld [vmem:[#allocation2 + $0xe8] sm:$0xf]
    %v92 = vld [vmem:[#allocation2 + $0xec] sm:$0xf]
    %v93 = vld [vmem:[#allocation2 + $0xf0] sm:$0xf]
    %v94 = vld [vmem:[#allocation2 + $0xf4] sm:$0xf]
    %v95 = vld [vmem:[#allocation2 + $0xf8] sm:$0xf]
    %v96 = vld [vmem:[#allocation2 + $0xfc] sm:$0xf]
    %v97 = vld [vmem:[%s2] sm:$0x1]
    %v98 = vld [vmem:[%s2 + $0x1] sm:$0x1]
    %v99 = vld [vmem:[%s2 + $0x2] sm:$0x1]
    %v100 = vld [vmem:[%s2 + $0x3] sm:$0x1]
    %v101 = vperm.slane %v97, 0
    %v118 = vunpack.c.l.b16 %v33
    %v119 = vunpack.c.l.b16 %v34
    %v120 = vunpack.c.l.b16 %v35
    %v121 = vunpack.c.l.b16 %v36
    %v122 = vunpack.c.l.b16 %v37
    %v123 = vunpack.c.l.b16 %v38
    %v124 = vunpack.c.l.b16 %v39
    %v125 = vunpack.c.l.b16 %v40
    %v126 = vunpack.c.l.b16 %v41
    %v127 = vunpack.c.l.b16 %v42
    %v128 = vunpack.c.l.b16 %v43
    %v129 = vunpack.c.l.b16 %v44
    %v130 = vunpack.c.l.b16 %v45
    %v131 = vunpack.c.l.b16 %v46
    %v132 = vunpack.c.l.b16 %v47
    %v133 = vunpack.c.l.b16 %v48
    %v134 = vpack.c.b16 %v119, %v118
    %v135 = vpack.c.b16 %v121, %v120
    %v136 = vpack.c.b16 %v123, %v122
    %v137 = vpack.c.b16 %v125, %v124
    %v138 = vpack.c.b16 %v127, %v126
    %v139 = vpack.c.b16 %v129, %v128
    %v140 = vpack.c.b16 %v131, %v130
    %v141 = vpack.c.b16 %v133, %v132
    %150 = vmatpush.bf16.msra.mxu0 %v141
    %151 = vmatpush.bf16.msra.mxu0 %v140
    %152 = vmatpush.bf16.msra.mxu0 %v139
    %153 = vmatpush.bf16.msra.mxu0 %v138
    %154 = vmatpush.bf16.msra.mxu0 %v137
    %155 = vmatpush.bf16.msra.mxu0 %v136
    %156 = vmatpush.bf16.msra.mxu0 %v135
    %157 = vmatpush.bf16.msra.mxu0 %v134
    %158 = vmatmul.bf16.gmra.mxu0 %v32
    %v159 = vpop.f32.mrf.mxu0
    %v160 = vadd.f32 %v101, %v159
    %v161 = vpop.f32.mrf.mxu0
    %162 = vdwg.mxu0
    %v163 = vmax.f32 %v160, 0.0
    %v164 = vpack.c.bf16 %v163, %v163
    %v165 = vperm.slane %v98, 0
    %v182 = vunpack.c.l.b16 %v49
    %v183 = vunpack.c.l.b16 %v50
    %v184 = vunpack.c.l.b16 %v51
    %v185 = vunpack.c.l.b16 %v52
    %v186 = vunpack.c.l.b16 %v53
    %v187 = vunpack.c.l.b16 %v54
    %v188 = vunpack.c.l.b16 %v55
    %v189 = vunpack.c.l.b16 %v56
    %v190 = vunpack.c.l.b16 %v57
    %v191 = vunpack.c.l.b16 %v58
    %v192 = vunpack.c.l.b16 %v59
    %v193 = vunpack.c.l.b16 %v60
    %v194 = vunpack.c.l.b16 %v61
    %v195 = vunpack.c.l.b16 %v62
    %v196 = vunpack.c.l.b16 %v63
    %v197 = vunpack.c.l.b16 %v64
    %v198 = vpack.c.b16 %v183, %v182
    %v199 = vpack.c.b16 %v185, %v184
    %v200 = vpack.c.b16 %v187, %v186
    %v201 = vpack.c.b16 %v189, %v188
    %v202 = vpack.c.b16 %v191, %v190
    %v203 = vpack.c.b16 %v193, %v192
    %v204 = vpack.c.b16 %v195, %v194
    %v205 = vpack.c.b16 %v197, %v196
    %214 = vmatpush.bf16.msra.mxu0 %v205
    %215 = vmatpush.bf16.msra.mxu0 %v204
    %216 = vmatpush.bf16.msra.mxu0 %v203
    %217 = vmatpush.bf16.msra.mxu0 %v202
    %218 = vmatpush.bf16.msra.mxu0 %v201
    %219 = vmatpush.bf16.msra.mxu0 %v200
    %220 = vmatpush.bf16.msra.mxu0 %v199
    %221 = vmatpush.bf16.msra.mxu0 %v198
    %222 = vmatmul.bf16.gmra.mxu0 %v164
    %v223 = vpop.f32.mrf.mxu0
    %v224 = vadd.f32 %v165, %v223
    %v225 = vpop.f32.mrf.mxu0
    %226 = vdwg.mxu0
    %v227 = vmax.f32 %v224, 0.0
    %v228 = vpack.c.bf16 %v227, %v227
    %v229 = vperm.slane %v99, 0
    %v246 = vunpack.c.l.b16 %v65
    %v247 = vunpack.c.l.b16 %v66
    %v248 = vunpack.c.l.b16 %v67
    %v249 = vunpack.c.l.b16 %v68
    %v250 = vunpack.c.l.b16 %v69
    %v251 = vunpack.c.l.b16 %v70
    %v252 = vunpack.c.l.b16 %v71
    %v253 = vunpack.c.l.b16 %v72
    %v254 = vunpack.c.l.b16 %v73
    %v255 = vunpack.c.l.b16 %v74
    %v256 = vunpack.c.l.b16 %v75
    %v257 = vunpack.c.l.b16 %v76
    %v258 = vunpack.c.l.b16 %v77
    %v259 = vunpack.c.l.b16 %v78
    %v260 = vunpack.c.l.b16 %v79
    %v261 = vunpack.c.l.b16 %v80
    %v262 = vpack.c.b16 %v247, %v246
    %v263 = vpack.c.b16 %v249, %v248
    %v264 = vpack.c.b16 %v251, %v250
    %v265 = vpack.c.b16 %v253, %v252
    %v266 = vpack.c.b16 %v255, %v254
    %v267 = vpack.c.b16 %v257, %v256
    %v268 = vpack.c.b16 %v259, %v258
    %v269 = vpack.c.b16 %v261, %v260
    %278 = vmatpush.bf16.msra.mxu0 %v269
    %279 = vmatpush.bf16.msra.mxu0 %v268
    %280 = vmatpush.bf16.msra.mxu0 %v267
    %281 = vmatpush.bf16.msra.mxu0 %v266
    %282 = vmatpush.bf16.msra.mxu0 %v265
    %283 = vmatpush.bf16.msra.mxu0 %v264
    %284 = vmatpush.bf16.msra.mxu0 %v263
    %285 = vmatpush.bf16.msra.mxu0 %v262
    %286 = vmatmul.bf16.gmra.mxu0 %v228
    %v287 = vpop.f32.mrf.mxu0
    %v288 = vadd.f32 %v229, %v287
    %v289 = vpop.f32.mrf.mxu0
    %290 = vdwg.mxu0
    %v291 = vadd.f32 %v288, %v288
    %v292 = vsub.f32 %v291, %v291
    %v293 = vmul.f32 %v292, %v292
    %v294 = vmax.f32 %v293, 0.0
    %v295 = vpack.c.bf16 %v294, %v294
    %v296 = vperm.slane %v100, 0
    %v313 = vunpack.c.l.b16 %v81
    %v314 = vunpack.c.l.b16 %v82
    %v315 = vunpack.c.l.b16 %v83
    %v316 = vunpack.c.l.b16 %v84
    %v317 = vunpack.c.l.b16 %v85
    %v318 = vunpack.c.l.b16 %v86
    %v319 = vunpack.c.l.b16 %v87
    %v320 = vunpack.c.l.b16 %v88
    %v321 = vunpack.c.l.b16 %v89
    %v322 = vunpack.c.l.b16 %v90
    %v323 = vunpack.c.l.b16 %v91
    %v324 = vunpack.c.l.b16 %v92
    %v325 = vunpack.c.l.b16 %v93
    %v326 = vunpack.c.l.b16 %v94
    %v327 = vunpack.c.l.b16 %v95
    %v328 = vunpack.c.l.b16 %v96
    %v329 = vpack.c.b16 %v314, %v313
    %v330 = vpack.c.b16 %v316, %v315
    %v331 = vpack.c.b16 %v318, %v317
    %v332 = vpack.c.b16 %v320, %v319
    %v333 = vpack.c.b16 %v322, %v321
    %v334 = vpack.c.b16 %v324, %v323
    %v335 = vpack.c.b16 %v326, %v325
    %v336 = vpack.c.b16 %v328, %v327
    %345 = vmatpush.bf16.msra.mxu0 %v336
    %346 = vmatpush.bf16.msra.mxu0 %v335
    %347 = vmatpush.bf16.msra.mxu0 %v334
    %348 = vmatpush.bf16.msra.mxu0 %v333
    %349 = vmatpush.bf16.msra.mxu0 %v332
    %350 = vmatpush.bf16.msra.mxu0 %v331
    %351 = vmatpush.bf16.msra.mxu0 %v330
    %352 = vmatpush.bf16.msra.mxu0 %v329
    %353 = vmatmul.bf16.gmra.mxu0 %v295
    %v354 = vpop.f32.mrf.mxu0
    %v355 = vadd.f32 %v296, %v354
    %v356 = vpop.f32.mrf.mxu0
    %357 = vdwg.mxu0
    %358 = vst [vmem:[#allocation5] sm:$0x3] %v355
    // Predicated region
    $region18: #{toy_testmodel_forward.1} parent=1 // pred_check
      _
    $region19: #{toy_testmodel_forward.1} parent=1 // pred_check_branch
      %360 = sbr.rel (0) target = $region21
    $region20: #{toy_testmodel_forward.1} parent=1 // pred_region
      %362 = vsyncadd [#allocation4], 0
      %s364 = sshll.u32 [#allocation5], 4
      %s365 = int_to_ptr.vmem [resolvable:$true] %s364
      %s366 = sshll.u32 %s3, 4
      %s367 = int_to_ptr.hbm [resolvable:$true] %s366
      %369 = dma.vmem_to_hbm [thread:$0]  %s365, 32, %s367, [#allocation4]
    $region21: #{toy_testmodel_forward.1} parent=1 // pred_fallthru
      _
    // Predicated region
    $region22: #{toy_testmodel_forward.1} parent=1 // pred_check
      _
    $region23: #{toy_testmodel_forward.1} parent=1 // pred_check_branch
      %371 = sbr.rel (0) target = $region25
    $region24: #{toy_testmodel_forward.1} parent=1 // pred_region
      %373 = dma.done [#allocation4], 32
    $region25: #{toy_testmodel_forward.1} parent=1 // pred_fallthru
      _
    %374 = vsyncpa [#allocation3], 1
    %375 = vsyncpa [#allocation4], 1

</llo_original>
